<compile_context>
chip_gen: v5e
topology: v5e:2x2
jax: 0.10.0
libtpu: 0.0.40
codegen_flags: <defaults>
</compile_context>

<pallas_src>
import functools

import jax
import jax.numpy as jnp
import numpy as np
from jax.experimental import pallas as pl
from jax.experimental.pallas import tpu as pltpu


# ----------------------------------------------------------------------------
# helpers
# ----------------------------------------------------------------------------
def _round_up(v, m=128):
    return ((v + m - 1) // m) * m


def _pad_lanes(x, target):
    x = x.astype(jnp.float32)
    return jnp.pad(x, ((0, 0), (0, target - x.shape[1])))


# ----------------------------------------------------------------------------
# Fused kernel: adjacency + top-K + matmul + psi + aggregation (one launch)
# ----------------------------------------------------------------------------
def _gcn_fused_kernel(xh_ref, xp_ref, xx_ref, wc_ref, psib_ref, bias_ref,
                      o_ref, *, k_top, sigma, eps):
    n = xh_ref.shape[0]
    row_i = jax.lax.broadcasted_iota(jnp.int32, (n, n), 0)
    col_i = jax.lax.broadcasted_iota(jnp.int32, (n, n), 1)
    eye = row_i == col_i
    row_f = row_i.astype(jnp.float32)
    col_f = col_i.astype(jnp.float32)

    def pair_dist(x):
        # Gram identity ||xi - xj||^2 = ni + nj - 2*xi.xj -> one MXU matmul.
        # Norms come from the Gram diagonal so the distance diagonal is an
        # exact 0 (matches torch.norm of the broadcast difference).
        g = jnp.einsum("nd,md->nm", x, x, preferred_element_type=jnp.float32)
        gd = jnp.where(eye, g, 0.0)
        nr = jnp.sum(gd, axis=1, keepdims=True)          # (N, 1)  ||xi||^2
        nc = jnp.sum(gd, axis=0, keepdims=True)          # (1, N)  ||xj||^2
        return jnp.sqrt(jnp.maximum(nr + nc - 2.0 * g, 0.0))

    def minmax_exp(d, scale):
        mn = jnp.min(d)
        mx = jnp.max(d)
        # Guard the degenerate all-equal-distances case (reference -> NaN).
        den = jnp.where(mx - mn > 0.0, mx - mn, 1.0)
        return jnp.exp(-((d - mn) / den) * scale)

    # NOTE: the extra /2 inside the exp for WH (absent for Wl) matches the
    # PyTorch reference.
    who = pair_dist(xh_ref[...] / (sigma + eps))
    wlo = pair_dist(xp_ref[...])
    ww = minmax_exp(who, 0.5) + 0.2 * minmax_exp(wlo, 1.0)   # (N, N), symmetric

    # --- in-kernel top-K: K iterations of first-occurrence argmax + knock-out.
    neg = jnp.float32(-1e30)

    def topk_mask(axis, idx_f):
        w = ww
        m = jnp.zeros((n, n), jnp.float32)
        for _ in range(k_top):                      # k_top is static and small
            best = jnp.max(w, axis=axis, keepdims=True)
            cand = w >= best
            first = jnp.min(jnp.where(cand, idx_f, float(n)),
                            axis=axis, keepdims=True)
            sel = idx_f == first
            m = jnp.where(sel, 1.0, m)
            w = jnp.where(sel, neg, w)
        return m

    mask = topk_mask(1, col_f)          # row-wise top-K == torch.topk(WW, K)
    # WW is exactly symmetric, so column-wise top-K of WW equals mask.T
    # (avoids an in-kernel transpose).
    mask_t = topk_mask(0, row_f)
    adj = jnp.where(mask + mask_t > 0.0, 1.0, 0.0)           # binary adjacency

    # --- one 256-wide MXU pass: [x | xw] = XX @ [W | W @ psi_w'] ---
    xc = jnp.dot(xx_ref[...], wc_ref[...], preferred_element_type=jnp.float32)
    fp = wc_ref.shape[1] // 2
    x = xc[:, :fp]                      # static 128-aligned lane slices (free)
    xw = xc[:, fp:]

    # --- factorized psi + aggregation (adj binary => O(N*F)) ---
    # Off-diagonal edge in column j: att = sigmoid(2*xw[j] + psi_b'), identical
    # for every i with adj[i,j]==1, so the (N,N,F) tensor collapses to (N,F).
    sig = 1.0 / (1.0 + jnp.exp(-(2.0 * xw + psib_ref[...])))     # (N, Fp)
    deg = jnp.sum(adj, axis=1, keepdims=True)        # (N,1); adj symmetric => col sums
    self_loop = jnp.sum(jnp.where(eye, adj, 0.0), axis=1, keepdims=True)  # adj[j,j]
    coef = self_loop + (deg - self_loop) * sig                   # (N, Fp)
    o_ref[...] = x * coef + bias_ref[...]


# ----------------------------------------------------------------------------
# OURS_GCN / GCN forward
# ----------------------------------------------------------------------------
def _prep_layer(prm, f, fp):
    pad = fp - f
    w = jnp.pad(prm["weight"].astype(jnp.float32), ((0, pad), (0, pad)))
    # Fold eval-mode BatchNorm into the psi Linear.
    psi_w = prm["psi_w"].astype(jnp.float32) * prm["bn_scale"][None, :]
    psi_b = prm["psi_b"] * prm["bn_scale"] + prm["bn_shift"]
    psi_w = jnp.pad(psi_w, ((0, pad), (0, pad)))
    w_combo = jnp.concatenate([w, w @ psi_w], axis=1)            # (fp, 2*fp)
    psi_b = jnp.pad(psi_b, (0, pad)).reshape(1, fp)
    bias = jnp.pad(prm["bias"].astype(jnp.float32), (0, pad)).reshape(1, fp)
    return w_combo, psi_b, bias


def gcn_forward(inputs, layer_params, *, sigma=0.1):
    """PyTorch `GCN`: nn.Sequential of OURS_GCN layers over the 4-tuple."""
    XH, XP, XX, K = inputs
    k_top = int(K)                       # static (torch.topk also needs this)
    n, f = XX.shape
    dh = XH.shape[1]
    fp = _round_up(f)
    eps = float(np.finfo(float).eps)
    vmem = pl.BlockSpec(memory_space=pltpu.MemorySpace.VMEM)

    # Lane-dense padded activations; zero pads are exact for the L2 distances
    # and for the matmuls (padded weight rows/cols are zero).
    xh_pad = _pad_lanes(XH, _round_up(dh))
    xp_pad = _pad_lanes(XP, _round_up(XP.shape[1]))
    xx_pad = _pad_lanes(XX, fp)
    col_ids = jnp.arange(fp)

    out_pad = xx_pad
    for prm in layer_params:
        w_combo, psi_b, bias = _prep_layer(prm, f, fp)
        out_pad = pl.pallas_call(
            functools.partial(_gcn_fused_kernel, k_top=k_top,
                              sigma=sigma, eps=eps),
            in_specs=[vmem] * 6,
            out_specs=vmem,
            out_shape=jax.ShapeDtypeStruct((n, fp), jnp.float32),
            # TODO(synk): at production N, add a node-row grid with
            # dimension_semantics=("parallel",) to shard across v7x's two TCs.
        )(xh_pad, xp_pad, xx_pad, w_combo, psi_b, bias)
        # Stay in the padded lane-dense layout across layers.
        xx_pad = out_pad
        xh_pad = jnp.where(col_ids[None, :] < dh, out_pad, 0.0)

    out = out_pad[:, :f]                 # padded channels are exactly zero
    return out[:, :dh], XP, out, K


# ----------------------------------------------------------------------------
# Deterministic parameter initialization
# ----------------------------------------------------------------------------
def init_gcn(key, input_dim, output_dim, num_layers=1):
    def layer(k):
        ks = jax.random.split(k, 4)
        return {
            # OURS_GCN: weight/bias ~ N(0, 0.01)
            "weight": 0.01 * jax.random.normal(ks[0], (input_dim, output_dim), jnp.float32),
            "bias": 0.01 * jax.random.normal(ks[1], (output_dim,), jnp.float32),
            # f_psi Linear
            "psi_w": 0.1 * jax.random.normal(ks[2], (input_dim, output_dim), jnp.float32),
            "psi_b": 0.1 * jax.random.normal(ks[3], (output_dim,), jnp.float32),
            # eval-mode BatchNorm1d (gamma=1, beta=0, mean=0, var=1, eps=1e-5)
            "bn_scale": jnp.full((output_dim,), 1.0 / np.sqrt(1.0 + 1e-5), jnp.float32),
            "bn_shift": jnp.zeros((output_dim,), jnp.float32),
        }

    keys = jax.random.split(key, num_layers)
    return [layer(k) for k in keys]


# ----------------------------------------------------------------------------
# Main
# ----------------------------------------------------------------------------
if __name__ == "__main__":
    # Shapes as used inside the CGKR-DL Teacher: N graph nodes (batch), HSI
    # feature dim 24, position dim 2, fused feature dim 48, K nearest nodes.
    N, DH, DP, FEAT, K = 8, 24, 2, 48, 3

    params = init_gcn(jax.random.PRNGKey(0), FEAT, FEAT, num_layers=1)

    k1, k2, k3 = jax.random.split(jax.random.PRNGKey(0), 3)
    XH = jax.random.normal(k1, (N, DH), jnp.float32)
    XP = jax.random.normal(k2, (N, DP), jnp.float32)
    XX = jax.random.normal(k3, (N, FEAT), jnp.float32)

    fwd = jax.jit(lambda xh, xp, xx: gcn_forward((xh, xp, xx, K), params))
    outH, outP, out, _ = fwd(XH, XP, XX)
    jax.block_until_ready((outH, outP, out))

    assert out.shape == (N, FEAT)
    assert outH.shape == (N, DH)
    assert outP.shape == (N, DP)
    assert bool(jnp.all(jnp.isfinite(out))) and bool(jnp.all(jnp.isfinite(outH)))
    print("KERNEL_OK")
</pallas_src>

<mosaic_0001>
module attributes {stable_mosaic.version = 11 : i64} {
  func.func @_gcn_fused_kernel(%arg0: memref<8x128xf32, #tpu.memory_space<vmem>>, %arg1: memref<8x128xf32, #tpu.memory_space<vmem>>, %arg2: memref<8x128xf32, #tpu.memory_space<vmem>>, %arg3: memref<128x256xf32, #tpu.memory_space<vmem>>, %arg4: memref<1x128xf32, #tpu.memory_space<vmem>>, %arg5: memref<1x128xf32, #tpu.memory_space<vmem>>, %arg6: memref<8x128xf32, #tpu.memory_space<vmem>>) attributes {dimension_semantics = [], scalar_prefetch = 0 : i64, scratch_operands = 0 : i64, tpu.core_type = #tpu.core_type<tc>} {
    %0 = tpu.iota {dimensions = array<i32: 0>} : vector<8x8xi32>
    %1 = tpu.iota {dimensions = array<i32: 1>} : vector<8x8xi32>
    %2 = arith.cmpi eq, %0, %1 : vector<8x8xi32>
    %3 = arith.sitofp %0 : vector<8x8xi32> to vector<8x8xf32>
    %4 = arith.sitofp %1 : vector<8x8xi32> to vector<8x8xf32>
    %c0 = arith.constant 0 : index
    %c0_0 = arith.constant 0 : index
    %5 = vector.load %arg0[%c0, %c0_0] : memref<8x128xf32, #tpu.memory_space<vmem>>, vector<8x128xf32>
    %cst = arith.constant 1.000000e-01 : f32
    %6 = vector.broadcast %cst : f32 to vector<8x128xf32>
    %7 = arith.divf %5, %6 : vector<8x128xf32>
    "tpu.trace_start"() <{level = 10 : i32, message = "nd,md->nm"}> : () -> ()
    %cst_1 = arith.constant dense<0.000000e+00> : vector<8x8xf32>
    %8 = tpu.matmul %7, %7, %cst_1 {dimension_numbers = #tpu.dot_dimension_numbers<[1], [1], [0], [0], [0, 0, 1, 0], [], []>} : vector<8x128xf32>, vector<8x128xf32>, vector<8x8xf32> -> vector<8x8xf32>
    %cst_2 = arith.constant 0.000000e+00 : f32
    "tpu.trace_stop"() : () -> ()
    %9 = vector.broadcast %cst_2 : f32 to vector<8x8xf32>
    %10 = arith.select %2, %8, %9 : vector<8x8xi1>, vector<8x8xf32>
    %cst_3 = arith.constant dense<0.000000e+00> : vector<8xf32>
    %11 = vector.multi_reduction <add>, %10, %cst_3 [1] : vector<8x8xf32> to vector<8xf32>
    %12 = vector.shape_cast %11 : vector<8xf32> to vector<8x1xf32>
    %cst_4 = arith.constant dense<0.000000e+00> : vector<8xf32>
    %13 = vector.multi_reduction <add>, %10, %cst_4 [0] : vector<8x8xf32> to vector<8xf32>
    %14 = vector.shape_cast %13 : vector<8xf32> to vector<1x8xf32>
    %15 = vector.broadcast %12 : vector<8x1xf32> to vector<8x8xf32>
    %16 = vector.broadcast %14 : vector<1x8xf32> to vector<8x8xf32>
    %17 = arith.addf %15, %16 : vector<8x8xf32>
    %cst_5 = arith.constant 2.000000e+00 : f32
    %18 = vector.broadcast %cst_5 : f32 to vector<8x8xf32>
    %19 = arith.mulf %18, %8 : vector<8x8xf32>
    %20 = arith.subf %17, %19 : vector<8x8xf32>
    %cst_6 = arith.constant 0.000000e+00 : f32
    %21 = vector.broadcast %cst_6 : f32 to vector<8x8xf32>
    %22 = arith.maximumf %20, %21 : vector<8x8xf32>
    %23 = math.sqrt %22 : vector<8x8xf32>
    %c0_7 = arith.constant 0 : index
    %c0_8 = arith.constant 0 : index
    %24 = vector.load %arg1[%c0_7, %c0_8] : memref<8x128xf32, #tpu.memory_space<vmem>>, vector<8x128xf32>
    "tpu.trace_start"() <{level = 10 : i32, message = "nd,md->nm"}> : () -> ()
    %cst_9 = arith.constant dense<0.000000e+00> : vector<8x8xf32>
    %25 = tpu.matmul %24, %24, %cst_9 {dimension_numbers = #tpu.dot_dimension_numbers<[1], [1], [0], [0], [0, 0, 1, 0], [], []>} : vector<8x128xf32>, vector<8x128xf32>, vector<8x8xf32> -> vector<8x8xf32>
    %cst_10 = arith.constant 0.000000e+00 : f32
    "tpu.trace_stop"() : () -> ()
    %26 = vector.broadcast %cst_10 : f32 to vector<8x8xf32>
    %27 = arith.select %2, %25, %26 : vector<8x8xi1>, vector<8x8xf32>
    %cst_11 = arith.constant dense<0.000000e+00> : vector<8xf32>
    %28 = vector.multi_reduction <add>, %27, %cst_11 [1] : vector<8x8xf32> to vector<8xf32>
    %29 = vector.shape_cast %28 : vector<8xf32> to vector<8x1xf32>
    %cst_12 = arith.constant dense<0.000000e+00> : vector<8xf32>
    %30 = vector.multi_reduction <add>, %27, %cst_12 [0] : vector<8x8xf32> to vector<8xf32>
    %31 = vector.shape_cast %30 : vector<8xf32> to vector<1x8xf32>
    %32 = vector.broadcast %29 : vector<8x1xf32> to vector<8x8xf32>
    %33 = vector.broadcast %31 : vector<1x8xf32> to vector<8x8xf32>
    %34 = arith.addf %32, %33 : vector<8x8xf32>
    %cst_13 = arith.constant 2.000000e+00 : f32
    %35 = vector.broadcast %cst_13 : f32 to vector<8x8xf32>
    %36 = arith.mulf %35, %25 : vector<8x8xf32>
    %37 = arith.subf %34, %36 : vector<8x8xf32>
    %cst_14 = arith.constant 0.000000e+00 : f32
    %38 = vector.broadcast %cst_14 : f32 to vector<8x8xf32>
    %39 = arith.maximumf %37, %38 : vector<8x8xf32>
    %40 = math.sqrt %39 : vector<8x8xf32>
    %41 = vector.shape_cast %23 : vector<8x8xf32> to vector<1x8x8xf32>
    %cst_15 = arith.constant dense<0x7F800000> : vector<1xf32>
    %42 = vector.multi_reduction <minimumf>, %41, %cst_15 [1, 2] : vector<1x8x8xf32> to vector<1xf32>
    %43 = vector.shape_cast %42 : vector<1xf32> to vector<1x1x1xf32>
    %44 = vector.extract %43[0, 0, 0] : f32 from vector<1x1x1xf32>
    %45 = vector.shape_cast %23 : vector<8x8xf32> to vector<1x8x8xf32>
    %cst_16 = arith.constant dense<0xFF800000> : vector<1xf32>
    %46 = vector.multi_reduction <maximumf>, %45, %cst_16 [1, 2] : vector<1x8x8xf32> to vector<1xf32>
    %47 = vector.shape_cast %46 : vector<1xf32> to vector<1x1x1xf32>
    %48 = vector.extract %47[0, 0, 0] : f32 from vector<1x1x1xf32>
    %49 = arith.subf %48, %44 : f32
    %cst_17 = arith.constant 0.000000e+00 : f32
    %50 = arith.cmpf ogt, %49, %cst_17 : f32
    %51 = arith.subf %48, %44 : f32
    %cst_18 = arith.constant 1.000000e+00 : f32
    %52 = arith.select %50, %51, %cst_18 : f32
    %53 = vector.broadcast %44 : f32 to vector<8x8xf32>
    %54 = arith.subf %23, %53 : vector<8x8xf32>
    %55 = vector.broadcast %52 : f32 to vector<8x8xf32>
    %56 = arith.divf %54, %55 : vector<8x8xf32>
    %cst_19 = arith.constant 0.000000e+00 : f32
    %57 = vector.broadcast %cst_19 : f32 to vector<8x8xf32>
    %58 = arith.subf %57, %56 : vector<8x8xf32>
    %cst_20 = arith.constant 5.000000e-01 : f32
    %59 = vector.broadcast %cst_20 : f32 to vector<8x8xf32>
    %60 = arith.mulf %58, %59 : vector<8x8xf32>
    %61 = math.exp %60 : vector<8x8xf32>
    %62 = vector.shape_cast %40 : vector<8x8xf32> to vector<1x8x8xf32>
    %cst_21 = arith.constant dense<0x7F800000> : vector<1xf32>
    %63 = vector.multi_reduction <minimumf>, %62, %cst_21 [1, 2] : vector<1x8x8xf32> to vector<1xf32>
    %64 = vector.shape_cast %63 : vector<1xf32> to vector<1x1x1xf32>
    %65 = vector.extract %64[0, 0, 0] : f32 from vector<1x1x1xf32>
    %66 = vector.shape_cast %40 : vector<8x8xf32> to vector<1x8x8xf32>
    %cst_22 = arith.constant dense<0xFF800000> : vector<1xf32>
    %67 = vector.multi_reduction <maximumf>, %66, %cst_22 [1, 2] : vector<1x8x8xf32> to vector<1xf32>
    %68 = vector.shape_cast %67 : vector<1xf32> to vector<1x1x1xf32>
    %69 = vector.extract %68[0, 0, 0] : f32 from vector<1x1x1xf32>
    %70 = arith.subf %69, %65 : f32
    %cst_23 = arith.constant 0.000000e+00 : f32
    %71 = arith.cmpf ogt, %70, %cst_23 : f32
    %72 = arith.subf %69, %65 : f32
    %cst_24 = arith.constant 1.000000e+00 : f32
    %73 = arith.select %71, %72, %cst_24 : f32
    %74 = vector.broadcast %65 : f32 to vector<8x8xf32>
    %75 = arith.subf %40, %74 : vector<8x8xf32>
    %76 = vector.broadcast %73 : f32 to vector<8x8xf32>
    %77 = arith.divf %75, %76 : vector<8x8xf32>
    %cst_25 = arith.constant 0.000000e+00 : f32
    %78 = vector.broadcast %cst_25 : f32 to vector<8x8xf32>
    %79 = arith.subf %78, %77 : vector<8x8xf32>
    %cst_26 = arith.constant 1.000000e+00 : f32
    %80 = vector.broadcast %cst_26 : f32 to vector<8x8xf32>
    %81 = arith.mulf %79, %80 : vector<8x8xf32>
    %82 = math.exp %81 : vector<8x8xf32>
    %cst_27 = arith.constant 2.000000e-01 : f32
    %83 = vector.broadcast %cst_27 : f32 to vector<8x8xf32>
    %84 = arith.mulf %83, %82 : vector<8x8xf32>
    %85 = arith.addf %61, %84 : vector<8x8xf32>
    %cst_28 = arith.constant 0.000000e+00 : f32
    %86 = vector.broadcast %cst_28 : f32 to vector<8x8xf32>
    %cst_29 = arith.constant dense<0xFF800000> : vector<8xf32>
    %87 = vector.multi_reduction <maximumf>, %85, %cst_29 [1] : vector<8x8xf32> to vector<8xf32>
    %88 = vector.shape_cast %87 : vector<8xf32> to vector<8x1xf32>
    %89 = vector.broadcast %88 : vector<8x1xf32> to vector<8x8xf32>
    %90 = arith.cmpf oge, %85, %89 : vector<8x8xf32>
    %cst_30 = arith.constant 8.000000e+00 : f32
    %91 = vector.broadcast %cst_30 : f32 to vector<8x8xf32>
    %92 = arith.select %90, %4, %91 : vector<8x8xi1>, vector<8x8xf32>
    %cst_31 = arith.constant dense<0x7F800000> : vector<8xf32>
    %93 = vector.multi_reduction <minimumf>, %92, %cst_31 [1] : vector<8x8xf32> to vector<8xf32>
    %94 = vector.shape_cast %93 : vector<8xf32> to vector<8x1xf32>
    %95 = vector.broadcast %94 : vector<8x1xf32> to vector<8x8xf32>
    %96 = arith.cmpf oeq, %4, %95 : vector<8x8xf32>
    %cst_32 = arith.constant 1.000000e+00 : f32
    %97 = vector.broadcast %cst_32 : f32 to vector<8x8xf32>
    %98 = arith.select %96, %97, %86 : vector<8x8xi1>, vector<8x8xf32>
    %cst_33 = arith.constant -1.000000e+30 : f32
    %99 = vector.broadcast %cst_33 : f32 to vector<8x8xf32>
    %100 = arith.select %96, %99, %85 : vector<8x8xi1>, vector<8x8xf32>
    %cst_34 = arith.constant dense<0xFF800000> : vector<8xf32>
    %101 = vector.multi_reduction <maximumf>, %100, %cst_34 [1] : vector<8x8xf32> to vector<8xf32>
    %102 = vector.shape_cast %101 : vector<8xf32> to vector<8x1xf32>
    %103 = vector.broadcast %102 : vector<8x1xf32> to vector<8x8xf32>
    %104 = arith.cmpf oge, %100, %103 : vector<8x8xf32>
    %cst_35 = arith.constant 8.000000e+00 : f32
    %105 = vector.broadcast %cst_35 : f32 to vector<8x8xf32>
    %106 = arith.select %104, %4, %105 : vector<8x8xi1>, vector<8x8xf32>
    %cst_36 = arith.constant dense<0x7F800000> : vector<8xf32>
    %107 = vector.multi_reduction <minimumf>, %106, %cst_36 [1] : vector<8x8xf32> to vector<8xf32>
    %108 = vector.shape_cast %107 : vector<8xf32> to vector<8x1xf32>
    %109 = vector.broadcast %108 : vector<8x1xf32> to vector<8x8xf32>
    %110 = arith.cmpf oeq, %4, %109 : vector<8x8xf32>
    %cst_37 = arith.constant 1.000000e+00 : f32
    %111 = vector.broadcast %cst_37 : f32 to vector<8x8xf32>
    %112 = arith.select %110, %111, %98 : vector<8x8xi1>, vector<8x8xf32>
    %cst_38 = arith.constant -1.000000e+30 : f32
    %113 = vector.broadcast %cst_38 : f32 to vector<8x8xf32>
    %114 = arith.select %110, %113, %100 : vector<8x8xi1>, vector<8x8xf32>
    %cst_39 = arith.constant dense<0xFF800000> : vector<8xf32>
    %115 = vector.multi_reduction <maximumf>, %114, %cst_39 [1] : vector<8x8xf32> to vector<8xf32>
    %116 = vector.shape_cast %115 : vector<8xf32> to vector<8x1xf32>
    %117 = vector.broadcast %116 : vector<8x1xf32> to vector<8x8xf32>
    %118 = arith.cmpf oge, %114, %117 : vector<8x8xf32>
    %cst_40 = arith.constant 8.000000e+00 : f32
    %119 = vector.broadcast %cst_40 : f32 to vector<8x8xf32>
    %120 = arith.select %118, %4, %119 : vector<8x8xi1>, vector<8x8xf32>
    %cst_41 = arith.constant dense<0x7F800000> : vector<8xf32>
    %121 = vector.multi_reduction <minimumf>, %120, %cst_41 [1] : vector<8x8xf32> to vector<8xf32>
    %122 = vector.shape_cast %121 : vector<8xf32> to vector<8x1xf32>
    %123 = vector.broadcast %122 : vector<8x1xf32> to vector<8x8xf32>
    %124 = arith.cmpf oeq, %4, %123 : vector<8x8xf32>
    %cst_42 = arith.constant 1.000000e+00 : f32
    %125 = vector.broadcast %cst_42 : f32 to vector<8x8xf32>
    %126 = arith.select %124, %125, %112 : vector<8x8xi1>, vector<8x8xf32>
    %cst_43 = arith.constant 0.000000e+00 : f32
    %127 = vector.broadcast %cst_43 : f32 to vector<8x8xf32>
    %cst_44 = arith.constant dense<0xFF800000> : vector<8xf32>
    %128 = vector.multi_reduction <maximumf>, %85, %cst_44 [0] : vector<8x8xf32> to vector<8xf32>
    %129 = vector.shape_cast %128 : vector<8xf32> to vector<1x8xf32>
    %130 = vector.broadcast %129 : vector<1x8xf32> to vector<8x8xf32>
    %131 = arith.cmpf oge, %85, %130 : vector<8x8xf32>
    %cst_45 = arith.constant 8.000000e+00 : f32
    %132 = vector.broadcast %cst_45 : f32 to vector<8x8xf32>
    %133 = arith.select %131, %3, %132 : vector<8x8xi1>, vector<8x8xf32>
    %cst_46 = arith.constant dense<0x7F800000> : vector<8xf32>
    %134 = vector.multi_reduction <minimumf>, %133, %cst_46 [0] : vector<8x8xf32> to vector<8xf32>
    %135 = vector.shape_cast %134 : vector<8xf32> to vector<1x8xf32>
    %136 = vector.broadcast %135 : vector<1x8xf32> to vector<8x8xf32>
    %137 = arith.cmpf oeq, %3, %136 : vector<8x8xf32>
    %cst_47 = arith.constant 1.000000e+00 : f32
    %138 = vector.broadcast %cst_47 : f32 to vector<8x8xf32>
    %139 = arith.select %137, %138, %127 : vector<8x8xi1>, vector<8x8xf32>
    %cst_48 = arith.constant -1.000000e+30 : f32
    %140 = vector.broadcast %cst_48 : f32 to vector<8x8xf32>
    %141 = arith.select %137, %140, %85 : vector<8x8xi1>, vector<8x8xf32>
    %cst_49 = arith.constant dense<0xFF800000> : vector<8xf32>
    %142 = vector.multi_reduction <maximumf>, %141, %cst_49 [0] : vector<8x8xf32> to vector<8xf32>
    %143 = vector.shape_cast %142 : vector<8xf32> to vector<1x8xf32>
    %144 = vector.broadcast %143 : vector<1x8xf32> to vector<8x8xf32>
    %145 = arith.cmpf oge, %141, %144 : vector<8x8xf32>
    %cst_50 = arith.constant 8.000000e+00 : f32
    %146 = vector.broadcast %cst_50 : f32 to vector<8x8xf32>
    %147 = arith.select %145, %3, %146 : vector<8x8xi1>, vector<8x8xf32>
    %cst_51 = arith.constant dense<0x7F800000> : vector<8xf32>
    %148 = vector.multi_reduction <minimumf>, %147, %cst_51 [0] : vector<8x8xf32> to vector<8xf32>
    %149 = vector.shape_cast %148 : vector<8xf32> to vector<1x8xf32>
    %150 = vector.broadcast %149 : vector<1x8xf32> to vector<8x8xf32>
    %151 = arith.cmpf oeq, %3, %150 : vector<8x8xf32>
    %cst_52 = arith.constant 1.000000e+00 : f32
    %152 = vector.broadcast %cst_52 : f32 to vector<8x8xf32>
    %153 = arith.select %151, %152, %139 : vector<8x8xi1>, vector<8x8xf32>
    %cst_53 = arith.constant -1.000000e+30 : f32
    %154 = vector.broadcast %cst_53 : f32 to vector<8x8xf32>
    %155 = arith.select %151, %154, %141 : vector<8x8xi1>, vector<8x8xf32>
    %cst_54 = arith.constant dense<0xFF800000> : vector<8xf32>
    %156 = vector.multi_reduction <maximumf>, %155, %cst_54 [0] : vector<8x8xf32> to vector<8xf32>
    %157 = vector.shape_cast %156 : vector<8xf32> to vector<1x8xf32>
    %158 = vector.broadcast %157 : vector<1x8xf32> to vector<8x8xf32>
    %159 = arith.cmpf oge, %155, %158 : vector<8x8xf32>
    %cst_55 = arith.constant 8.000000e+00 : f32
    %160 = vector.broadcast %cst_55 : f32 to vector<8x8xf32>
    %161 = arith.select %159, %3, %160 : vector<8x8xi1>, vector<8x8xf32>
    %cst_56 = arith.constant dense<0x7F800000> : vector<8xf32>
    %162 = vector.multi_reduction <minimumf>, %161, %cst_56 [0] : vector<8x8xf32> to vector<8xf32>
    %163 = vector.shape_cast %162 : vector<8xf32> to vector<1x8xf32>
    %164 = vector.broadcast %163 : vector<1x8xf32> to vector<8x8xf32>
    %165 = arith.cmpf oeq, %3, %164 : vector<8x8xf32>
    %cst_57 = arith.constant 1.000000e+00 : f32
    %166 = vector.broadcast %cst_57 : f32 to vector<8x8xf32>
    %167 = arith.select %165, %166, %153 : vector<8x8xi1>, vector<8x8xf32>
    %168 = arith.addf %126, %167 : vector<8x8xf32>
    %cst_58 = arith.constant 0.000000e+00 : f32
    %169 = vector.broadcast %cst_58 : f32 to vector<8x8xf32>
    %170 = arith.cmpf ogt, %168, %169 : vector<8x8xf32>
    %cst_59 = arith.constant 1.000000e+00 : f32
    %cst_60 = arith.constant 0.000000e+00 : f32
    %171 = vector.broadcast %cst_59 : f32 to vector<8x8xf32>
    %172 = vector.broadcast %cst_60 : f32 to vector<8x8xf32>
    %173 = arith.select %170, %171, %172 : vector<8x8xi1>, vector<8x8xf32>
    %c0_61 = arith.constant 0 : index
    %c0_62 = arith.constant 0 : index
    %174 = vector.load %arg2[%c0_61, %c0_62] : memref<8x128xf32, #tpu.memory_space<vmem>>, vector<8x128xf32>
    %c0_63 = arith.constant 0 : index
    %c0_64 = arith.constant 0 : index
    %175 = vector.load %arg3[%c0_63, %c0_64] : memref<128x256xf32, #tpu.memory_space<vmem>>, vector<128x256xf32>
    %cst_65 = arith.constant dense<0.000000e+00> : vector<8x256xf32>
    %176 = tpu.matmul %174, %175, %cst_65 {dimension_numbers = #tpu.dot_dimension_numbers<[1], [0], [0], [1], [0, 0, 1, 1], [], []>} : vector<8x128xf32>, vector<128x256xf32>, vector<8x256xf32> -> vector<8x256xf32>
    %177 = vector.extract_strided_slice %176 {offsets = [0, 0], sizes = [8, 128], strides = [1, 1]} : vector<8x256xf32> to vector<8x128xf32>
    %178 = vector.extract_strided_slice %176 {offsets = [0, 128], sizes = [8, 128], strides = [1, 1]} : vector<8x256xf32> to vector<8x128xf32>
    %cst_66 = arith.constant 2.000000e+00 : f32
    %179 = vector.broadcast %cst_66 : f32 to vector<8x128xf32>
    %180 = arith.mulf %179, %178 : vector<8x128xf32>
    %c0_67 = arith.constant 0 : index
    %c0_68 = arith.constant 0 : index
    %181 = vector.load %arg4[%c0_67, %c0_68] : memref<1x128xf32, #tpu.memory_space<vmem>>, vector<1x128xf32>
    %182 = vector.broadcast %181 : vector<1x128xf32> to vector<8x128xf32>
    %183 = arith.addf %180, %182 : vector<8x128xf32>
    %cst_69 = arith.constant 0.000000e+00 : f32
    %184 = vector.broadcast %cst_69 : f32 to vector<8x128xf32>
    %185 = arith.subf %184, %183 : vector<8x128xf32>
    %186 = math.exp %185 : vector<8x128xf32>
    %cst_70 = arith.constant 1.000000e+00 : f32
    %187 = vector.broadcast %cst_70 : f32 to vector<8x128xf32>
    %188 = arith.addf %187, %186 : vector<8x128xf32>
    %cst_71 = arith.constant 1.000000e+00 : f32
    %189 = vector.broadcast %cst_71 : f32 to vector<8x128xf32>
    %190 = arith.divf %189, %188 : vector<8x128xf32>
    %cst_72 = arith.constant dense<0.000000e+00> : vector<8xf32>
    %191 = vector.multi_reduction <add>, %173, %cst_72 [1] : vector<8x8xf32> to vector<8xf32>
    %192 = vector.shape_cast %191 : vector<8xf32> to vector<8x1xf32>
    %cst_73 = arith.constant 0.000000e+00 : f32
    %193 = vector.broadcast %cst_73 : f32 to vector<8x8xf32>
    %194 = arith.select %2, %173, %193 : vector<8x8xi1>, vector<8x8xf32>
    %cst_74 = arith.constant dense<0.000000e+00> : vector<8xf32>
    %195 = vector.multi_reduction <add>, %194, %cst_74 [1] : vector<8x8xf32> to vector<8xf32>
    %196 = vector.shape_cast %195 : vector<8xf32> to vector<8x1xf32>
    %197 = arith.subf %192, %196 : vector<8x1xf32>
    %198 = vector.broadcast %197 : vector<8x1xf32> to vector<8x128xf32>
    %199 = arith.mulf %198, %190 : vector<8x128xf32>
    %200 = vector.broadcast %196 : vector<8x1xf32> to vector<8x128xf32>
    %201 = arith.addf %200, %199 : vector<8x128xf32>
    %202 = arith.mulf %177, %201 : vector<8x128xf32>
    %c0_75 = arith.constant 0 : index
    %c0_76 = arith.constant 0 : index
    %203 = vector.load %arg5[%c0_75, %c0_76] : memref<1x128xf32, #tpu.memory_space<vmem>>, vector<1x128xf32>
    %204 = vector.broadcast %203 : vector<1x128xf32> to vector<8x128xf32>
    %205 = arith.addf %202, %204 : vector<8x128xf32>
    %c0_77 = arith.constant 0 : index
    %c0_78 = arith.constant 0 : index
    %206 = vector.load %arg6[%c0_77, %c0_78] : memref<8x128xf32, #tpu.memory_space<vmem>>, vector<8x128xf32>
    tpu.vector_store %arg6[%c0_77, %c0_78], %205 {strides = array<i32>} : memref<8x128xf32, #tpu.memory_space<vmem>>, vector<8x128xf32>,
    return
  }
}

</mosaic_0001>

<llo_original>
// kernel: _lambda_.1
$region0: #{_lambda_.1}
  #allocation0 [shape = 'u32[]', space=smem, size = 0x4, offset = 0x4, fixed_abs, tag = 'smem constant byte address 0x4 - core index']
  #allocation1 [shape = 'u32[72,128]{1,0:T(1,128)}', space=vmem, size = 0x9000, scoped, tag = 'internal scratch']
  %s0 = inlined_call_operand.vmem [shape: f32[8,128], index: 0, kind: input, shape index: {}]
  %s1 = inlined_call_operand.vmem [shape: f32[8,128], index: 1, kind: input, shape index: {}]
  %s2 = inlined_call_operand.vmem [shape: f32[8,128], index: 2, kind: input, shape index: {}]
  %s3 = inlined_call_operand.hbm [shape: f32[128,256], index: 3, kind: input, shape index: {}]
  %s4 = inlined_call_operand.vmem [shape: f32[1,128], index: 4, kind: input, shape index: {}]
  %s5 = inlined_call_operand.vmem [shape: f32[1,128], index: 5, kind: input, shape index: {}]
  %s6 = inlined_call_operand.vmem [shape: f32[8,128], index: 6, kind: output, shape index: {}]
  %s7 = sld [smem:[#allocation0]]
  $region38: #{_lambda_.1} parent=0
    _
  %s9 = ssub.s32 1, %s7
  %s10 = scalar_select 0, %s9, %s7
  $region1: #{_lambda_.1} parent=0
    #allocation2 [shape = 'u8[131072]{0}', space=vmem, size = 0x20000, scoped, tag = 'input window, operand 3, single buffered']
    #allocation3 [shape = 's32[1]{0}', space=sflag, size = 0x4, scoped, tag = 'scoped memory for _lambda_.1']
    %11 = vsyncpa [#allocation3], 0
    // Predicated region
    $region2: #{_lambda_.1} parent=1 // pred_check
      _
    $region3: #{_lambda_.1} parent=1 // pred_check_branch
      %13 = sbr.rel (0) target = $region5
    $region4: #{_lambda_.1} parent=1 // pred_region
      _
    $region5: #{_lambda_.1} parent=1 // pred_fallthru
      _
    // Predicated region
    $region6: #{_lambda_.1} parent=1 // pred_check
      _
    $region7: #{_lambda_.1} parent=1 // pred_check_branch
      %15 = sbr.rel (0) target = $region9
    $region8: #{_lambda_.1} parent=1 // pred_region
      _
    $region9: #{_lambda_.1} parent=1 // pred_fallthru
      _
    // Predicated region
    $region10: #{_lambda_.1} parent=1 // pred_check
      _
    $region11: #{_lambda_.1} parent=1 // pred_check_branch
      %17 = sbr.rel (0) target = $region13
    $region12: #{_lambda_.1} parent=1 // pred_region
      _
    $region13: #{_lambda_.1} parent=1 // pred_fallthru
      _
    // Predicated region
    $region14: #{_lambda_.1} parent=1 // pred_check
      _
    $region15: #{_lambda_.1} parent=1 // pred_check_branch
      %19 = sbr.rel (0) target = $region17
    $region16: #{_lambda_.1} parent=1 // pred_region
      %21 = vsyncadd [#allocation3], 0
      %s22 = sshll.u32 %s3, 4
      %s23 = int_to_ptr.hbm [resolvable:$true] %s22
      %s24 = sshll.u32 [#allocation2], 4
      %s25 = int_to_ptr.vmem [resolvable:$true] %s24
      %30 = dma.hbm_to_vmem [thread:$0]  %s23, 4096, %s25, [#allocation3], 256, 256, 16
    $region17: #{_lambda_.1} parent=1 // pred_fallthru
      _
    // Predicated region
    $region18: #{_lambda_.1} parent=1 // pred_check
      _
    $region19: #{_lambda_.1} parent=1 // pred_check_branch
      %32 = sbr.rel (0) target = $region21
    $region20: #{_lambda_.1} parent=1 // pred_region
      _
    $region21: #{_lambda_.1} parent=1 // pred_fallthru
      _
    // Predicated region
    $region22: #{_lambda_.1} parent=1 // pred_check
      _
    $region23: #{_lambda_.1} parent=1 // pred_check_branch
      %34 = sbr.rel (0) target = $region25
    $region24: #{_lambda_.1} parent=1 // pred_region
      _
    $region25: #{_lambda_.1} parent=1 // pred_fallthru
      _
    // Predicated region
    $region26: #{_lambda_.1} parent=1 // pred_check
      _
    $region27: #{_lambda_.1} parent=1 // pred_check_branch
      %36 = sbr.rel (0) target = $region29
    $region28: #{_lambda_.1} parent=1 // pred_region
      %38 = dma.done [#allocation3], 4096
    $region29: #{_lambda_.1} parent=1 // pred_fallthru
      _
    %v39 = vlaneseq
    %v40 = vshrl.u32 %v39, 7
    %v41 = vlaneseq
    %v42 = vand.u32 %v41, 127
    %vm43 = vcmp.eq.s32.totalorder %v40, %v42
    %v44 = vcvt.s32.f32 %v40
    %v45 = vcvt.s32.f32 %v42
    %v46 = vld [vmem:[%s0] sm:$0xff]
    %v47 = vrcp.pop 0.1
    %v48 = vmul.f32 0.1, %v47
    %v49 = vsub.f32 1.0, %v48
    %v50 = vmul.f32 %v47, %v49
    %v51 = vadd.f32 %v47, %v50
    %vm52 = vweird.f32 %v47
    %v53 = vsel %vm52, %v47, %v51
    %v54 = vmul.f32 %v46, %v53
    %55 = vmatpush.xpose.msra.mxu0 0.0
    %56 = vmatpush.xpose.msra.mxu0 0.0
    %57 = vmatpush.xpose.msra.mxu0 0.0
    %58 = vmatpush.xpose.msra.mxu0 0.0
    %59 = vmatpush.xpose.msra.mxu0 0.0
    %60 = vmatpush.xpose.msra.mxu0 0.0
    %61 = vmatpush.xpose.msra.mxu0 0.0
    %62 = vmatpush.xpose.msra.mxu0 0.0
    %63 = vmatpush.xpose.msra.mxu0 0.0
    %64 = vmatpush.xpose.msra.mxu0 0.0
    %65 = vmatpush.xpose.msra.mxu0 0.0
    %66 = vmatpush.xpose.msra.mxu0 0.0
    %67 = vmatpush.xpose.msra.mxu0 0.0
    %68 = vmatpush.xpose.msra.mxu0 0.0
    %69 = vmatpush.xpose.msra.mxu0 0.0
    %70 = vmatpush.xpose.msra.mxu0 %v54
    %71 = vmatmul.f32.gmra.mxu0 %v54
    %v72 = vpop.f32.mrf.mxu0
    %v73 = vadd.f32 0.0, %v72
    %74 = vdwg.mxu0
    %v75 = vsel %vm43, %v73, 0.0
    %vm76 = vcmask 64512
    %v77 = vsel %vm76, %v75, 0.0
    %78 = vadd.xlane.f32.xlu0 %v77
    %v79 = vpop.xlane.xlu0 %78
    %v80 = vrot.slane %v77, 4
    %v81 = vadd.f32 %v77, %v80
    %v82 = vrot.slane %v81, 2
    %v83 = vadd.f32 %v81, %v82
    %v84 = vrot.slane %v83, 1
    %v85 = vadd.f32 %v83, %v84
    %v86 = vadd.f32 %v79, %v85
    %v87 = vmul.f32 %v73, 2.0
    %v88 = vsub.f32 %v86, %v87
    %v89 = vmax.f32 %v88, 0.0
    %v90 = vrsqrt.pop %v89
    %v91 = vmul.f32 %v90, %v89
    %v92 = vmul.f32 %v91, %v90
    %v93 = vmul.f32 0.5, %v92
    %v94 = vsub.f32 1.5, %v93
    %v95 = vmul.f32 %v90, %v94
    %v96 = vmul.f32 %v89, %v95
    %vm97 = vcmp.eq.f32.partialorder %v89, inf
    %v98 = vsel %vm97, %v89, %v96
    %vm99 = vcmp.eq.f32.partialorder %v89, 0.0
    %v100 = vand.u32 %v89, 2147483648
    %v101 = vsel %vm99, %v100, %v98
    %v102 = vld [vmem:[%s1] sm:$0xff]
    %103 = vmatpush.xpose.msra.mxu0 0.0
    %104 = vmatpush.xpose.msra.mxu0 0.0
    %105 = vmatpush.xpose.msra.mxu0 0.0
    %106 = vmatpush.xpose.msra.mxu0 0.0
    %107 = vmatpush.xpose.msra.mxu0 0.0
    %108 = vmatpush.xpose.msra.mxu0 0.0
    %109 = vmatpush.xpose.msra.mxu0 0.0
    %110 = vmatpush.xpose.msra.mxu0 0.0
    %111 = vmatpush.xpose.msra.mxu0 0.0
    %112 = vmatpush.xpose.msra.mxu0 0.0
    %113 = vmatpush.xpose.msra.mxu0 0.0
    %114 = vmatpush.xpose.msra.mxu0 0.0
    %115 = vmatpush.xpose.msra.mxu0 0.0
    %116 = vmatpush.xpose.msra.mxu0 0.0
    %117 = vmatpush.xpose.msra.mxu0 0.0
    %118 = vmatpush.xpose.msra.mxu0 %v102
    %119 = vmatmul.f32.gmra.mxu0 %v102
    %v120 = vpop.f32.mrf.mxu0
    %v121 = vadd.f32 0.0, %v120
    %122 = vdwg.mxu0
    %v123 = vsel %vm43, %v121, 0.0
    %v124 = vsel %vm76, %v123, 0.0
    %125 = vadd.xlane.f32.xlu0 %v124
    %v126 = vpop.xlane.xlu0 %125
    %v127 = vrot.slane %v124, 4
    %v128 = vadd.f32 %v124, %v127
    %v129 = vrot.slane %v128, 2
    %v130 = vadd.f32 %v128, %v129
    %v131 = vrot.slane %v130, 1
    %v132 = vadd.f32 %v130, %v131
    %v133 = vadd.f32 %v126, %v132
    %v134 = vmul.f32 %v121, 2.0
    %v135 = vsub.f32 %v133, %v134
    %v136 = vmax.f32 %v135, 0.0
    %v137 = vrsqrt.pop %v136
    %v138 = vmul.f32 %v137, %v136
    %v139 = vmul.f32 %v138, %v137
    %v140 = vmul.f32 0.5, %v139
    %v141 = vsub.f32 1.5, %v140
    %v142 = vmul.f32 %v137, %v141
    %v143 = vmul.f32 %v136, %v142
    %vm144 = vcmp.eq.f32.partialorder %v136, inf
    %v145 = vsel %vm144, %v136, %v143
    %vm146 = vcmp.eq.f32.partialorder %v136, 0.0
    %v147 = vand.u32 %v136, 2147483648
    %v148 = vsel %vm146, %v147, %v145
    %v149 = vsel %vm76, %v101, inf
    %150 = vmin.xlane.f32.xlu0 %v149
    %v151 = vpop.xlane.xlu0 %150
    %v152 = vrot.slane %v151, 4
    %v153 = vmin.f32 %v151, %v152
    %v154 = vrot.slane %v153, 2
    %v155 = vmin.f32 %v153, %v154
    %v156 = vrot.slane %v155, 1
    %v157 = vmin.f32 %v155, %v156
    %s158 = vtos %v157
    %v159 = vsel %vm76, %v101, -inf
    %160 = vmax.xlane.f32.xlu0 %v159
    %v161 = vpop.xlane.xlu0 %160
    %v162 = vrot.slane %v161, 4
    %v163 = vmax.f32 %v161, %v162
    %v164 = vrot.slane %v163, 2
    %v165 = vmax.f32 %v163, %v164
    %v166 = vrot.slane %v165, 1
    %v167 = vmax.f32 %v165, %v166
    %s168 = vtos %v167
    %s169 = ssub.f32 %s168, %s158
    %p170 = scmp.gt.f32.partialorder %s169, 0.0
    %s171 = scalar_select %p170, %s169, 1.0
    %v172 = vstv %s158
    %v173 = vsub.f32 %v101, %v172
    %v174 = vstv %s171
    %v175 = vrcp.pop %v174
    %v176 = vmul.f32 %v174, %v175
    %v177 = vsub.f32 1.0, %v176
    %v178 = vmul.f32 %v175, %v177
    %v179 = vadd.f32 %v175, %v178
    %vm180 = vweird.f32 %v174
    %vm181 = vweird.f32 %v175
    %vm182 = vmor %vm180, %vm181
    %v183 = vsel %vm182, %v175, %v179
    %v184 = vand.u32 2147483647, %v174
    %vm185 = vcmp.eq.f32.partialorder %v184, 8.507059e+37
    %v186 = vand.u32 %v174, 2147483648
    %v187 = vor.u32 1.1754944e-38, %v186
    %v188 = vsel %vm185, %v187, %v183
    %v189 = vmul.f32 %v173, %v188
    %v190 = vsub.f32 0.0, %v189
    %v191 = vmul.f32 %v190, 0.5
    %v192 = vmul.f32 %v191, 1.442695
    %v193 = vpow.pop %v192
    %v194 = vsel %vm76, %v148, inf
    %195 = vmin.xlane.f32.xlu0 %v194
    %v196 = vpop.xlane.xlu0 %195
    %v197 = vrot.slane %v196, 4
    %v198 = vmin.f32 %v196, %v197
    %v199 = vrot.slane %v198, 2
    %v200 = vmin.f32 %v198, %v199
    %v201 = vrot.slane %v200, 1
    %v202 = vmin.f32 %v200, %v201
    %s203 = vtos %v202
    %v204 = vsel %vm76, %v148, -inf
    %205 = vmax.xlane.f32.xlu0 %v204
    %v206 = vpop.xlane.xlu0 %205
    %v207 = vrot.slane %v206, 4
    %v208 = vmax.f32 %v206, %v207
    %v209 = vrot.slane %v208, 2
    %v210 = vmax.f32 %v208, %v209
    %v211 = vrot.slane %v210, 1
    %v212 = vmax.f32 %v210, %v211
    %s213 = vtos %v212
    %s214 = ssub.f32 %s213, %s203
    %p215 = scmp.gt.f32.partialorder %s214, 0.0
    %s216 = scalar_select %p215, %s214, 1.0
    %v217 = vstv %s203
    %v218 = vsub.f32 %v148, %v217
    %v219 = vstv %s216
    %v220 = vrcp.pop %v219
    %v221 = vmul.f32 %v219, %v220
    %v222 = vsub.f32 1.0, %v221
    %v223 = vmul.f32 %v220, %v222
    %v224 = vadd.f32 %v220, %v223
    %vm225 = vweird.f32 %v219
    %vm226 = vweird.f32 %v220
    %vm227 = vmor %vm225, %vm226
    %v228 = vsel %vm227, %v220, %v224
    %v229 = vand.u32 2147483647, %v219
    %vm230 = vcmp.eq.f32.partialorder %v229, 8.507059e+37
    %v231 = vand.u32 %v219, 2147483648
    %v232 = vor.u32 1.1754944e-38, %v231
    %v233 = vsel %vm230, %v232, %v228
    %v234 = vmul.f32 %v218, %v233
    %v235 = vsub.f32 0.0, %v234
    %v236 = vmul.f32 %v235, 1.442695
    %v237 = vpow.pop %v236
    %v238 = vmul.f32 %v237, 0.2
    %v239 = vadd.f32 %v193, %v238
    %v240 = vsel %vm76, %v239, -inf
    %241 = vmax.xlane.f32.xlu0 %v240
    %v242 = vpop.xlane.xlu0 %241
    %vm243 = vcmp.ge.f32.partialorder %v239, %v242
    %v244 = vsel %vm243, %v45, 8.0
    %v245 = vsel %vm76, %v244, inf
    %246 = vmin.xlane.f32.xlu0 %v245
    %v247 = vpop.xlane.xlu0 %246
    %vm248 = vcmp.eq.f32.partialorder %v45, %v247
    %v249 = vsel %vm248, 1.0, 0.0
    %v250 = vsel %vm248, -1e+30, %v239
    %v251 = vsel %vm76, %v250, -inf
    %252 = vmax.xlane.f32.xlu0 %v251
    %v253 = vpop.xlane.xlu0 %252
    %vm254 = vcmp.ge.f32.partialorder %v250, %v253
    %v255 = vsel %vm254, %v45, 8.0
    %v256 = vsel %vm76, %v255, inf
    %257 = vmin.xlane.f32.xlu0 %v256
    %v258 = vpop.xlane.xlu0 %257
    %vm259 = vcmp.eq.f32.partialorder %v45, %v258
    %v260 = vsel %vm259, 1.0, %v249
    %v261 = vsel %vm259, -1e+30, %v250
    %v262 = vsel %vm76, %v261, -inf
    %263 = vmax.xlane.f32.xlu0 %v262
    %v264 = vpop.xlane.xlu0 %263
    %vm265 = vcmp.ge.f32.partialorder %v261, %v264
    %v266 = vsel %vm265, %v45, 8.0
    %v267 = vsel %vm76, %v266, inf
    %268 = vmin.xlane.f32.xlu0 %v267
    %v269 = vpop.xlane.xlu0 %268
    %vm270 = vcmp.eq.f32.partialorder %v45, %v269
    %v271 = vsel %vm270, 1.0, %v260
    %v272 = vrot.slane %v240, 4
    %v273 = vmax.f32 %v240, %v272
    %v274 = vrot.slane %v273, 2
    %v275 = vmax.f32 %v273, %v274
    %v276 = vrot.slane %v275, 1
    %v277 = vmax.f32 %v275, %v276
    %vm278 = vcmp.ge.f32.partialorder %v239, %v277
    %v279 = vsel %vm278, %v44, 8.0
    %v280 = vsel %vm76, %v279, inf
    %v281 = vrot.slane %v280, 4
    %v282 = vmin.f32 %v280, %v281
    %v283 = vrot.slane %v282, 2
    %v284 = vmin.f32 %v282, %v283
    %v285 = vrot.slane %v284, 1
    %v286 = vmin.f32 %v284, %v285
    %vm287 = vcmp.eq.f32.partialorder %v44, %v286
    %v288 = vsel %vm287, 1.0, 0.0
    %v289 = vsel %vm287, -1e+30, %v239
    %v290 = vsel %vm76, %v289, -inf
    %v291 = vrot.slane %v290, 4
    %v292 = vmax.f32 %v290, %v291
    %v293 = vrot.slane %v292, 2
    %v294 = vmax.f32 %v292, %v293
    %v295 = vrot.slane %v294, 1
    %v296 = vmax.f32 %v294, %v295
    %vm297 = vcmp.ge.f32.partialorder %v289, %v296
    %v298 = vsel %vm297, %v44, 8.0
    %v299 = vsel %vm76, %v298, inf
    %v300 = vrot.slane %v299, 4
    %v301 = vmin.f32 %v299, %v300
    %v302 = vrot.slane %v301, 2
    %v303 = vmin.f32 %v301, %v302
    %v304 = vrot.slane %v303, 1
    %v305 = vmin.f32 %v303, %v304
    %vm306 = vcmp.eq.f32.partialorder %v44, %v305
    %v307 = vsel %vm306, 1.0, %v288
    %v308 = vsel %vm306, -1e+30, %v289
    %v309 = vsel %vm76, %v308, -inf
    %v310 = vrot.slane %v309, 4
    %v311 = vmax.f32 %v309, %v310
    %v312 = vrot.slane %v311, 2
    %v313 = vmax.f32 %v311, %v312
    %v314 = vrot.slane %v313, 1
    %v315 = vmax.f32 %v313, %v314
    %vm316 = vcmp.ge.f32.partialorder %v308, %v315
    %v317 = vsel %vm316, %v44, 8.0
    %v318 = vsel %vm76, %v317, inf
    %v319 = vrot.slane %v318, 4
    %v320 = vmin.f32 %v318, %v319
    %v321 = vrot.slane %v320, 2
    %v322 = vmin.f32 %v320, %v321
    %v323 = vrot.slane %v322, 1
    %v324 = vmin.f32 %v322, %v323
    %vm325 = vcmp.eq.f32.partialorder %v44, %v324
    %v326 = vsel %vm325, 1.0, %v307
    %v327 = vadd.f32 %v271, %v326
    %vm328 = vcmp.gt.f32.partialorder %v327, 0.0
    %v329 = vsel %vm328, 1.0, 0.0
    %v330 = vld [vmem:[%s2] sm:$0xff]
    %v331 = vld [vmem:[#allocation2] sm:$0xff]
    %v332 = vld [vmem:[#allocation2 + $0x8] sm:$0xff]
    %v333 = vld [vmem:[#allocation2 + $0x10] sm:$0xff]
    %v334 = vld [vmem:[#allocation2 + $0x18] sm:$0xff]
    %v335 = vld [vmem:[#allocation2 + $0x20] sm:$0xff]
    %v336 = vld [vmem:[#allocation2 + $0x28] sm:$0xff]
    %v337 = vld [vmem:[#allocation2 + $0x30] sm:$0xff]
    %v338 = vld [vmem:[#allocation2 + $0x38] sm:$0xff]
    %v339 = vld [vmem:[#allocation2 + $0x40] sm:$0xff]
    %v340 = vld [vmem:[#allocation2 + $0x48] sm:$0xff]
    %v341 = vld [vmem:[#allocation2 + $0x50] sm:$0xff]
    %v342 = vld [vmem:[#allocation2 + $0x58] sm:$0xff]
    %v343 = vld [vmem:[#allocation2 + $0x60] sm:$0xff]
    %v344 = vld [vmem:[#allocation2 + $0x68] sm:$0xff]
    %v345 = vld [vmem:[#allocation2 + $0x70] sm:$0xff]
    %v346 = vld [vmem:[#allocation2 + $0x78] sm:$0xff]
    %v347 = vld [vmem:[#allocation2 + $0x80] sm:$0xff]
    %v348 = vld [vmem:[#allocation2 + $0x88] sm:$0xff]
    %v349 = vld [vmem:[#allocation2 + $0x90] sm:$0xff]
    %v350 = vld [vmem:[#allocation2 + $0x98] sm:$0xff]
    %v351 = vld [vmem:[#allocation2 + $0xa0] sm:$0xff]
    %v352 = vld [vmem:[#allocation2 + $0xa8] sm:$0xff]
    %v353 = vld [vmem:[#allocation2 + $0xb0] sm:$0xff]
    %v354 = vld [vmem:[#allocation2 + $0xb8] sm:$0xff]
    %v355 = vld [vmem:[#allocation2 + $0xc0] sm:$0xff]
    %v356 = vld [vmem:[#allocation2 + $0xc8] sm:$0xff]
    %v357 = vld [vmem:[#allocation2 + $0xd0] sm:$0xff]
    %v358 = vld [vmem:[#allocation2 + $0xd8] sm:$0xff]
    %v359 = vld [vmem:[#allocation2 + $0xe0] sm:$0xff]
    %v360 = vld [vmem:[#allocation2 + $0xe8] sm:$0xff]
    %v361 = vld [vmem:[#allocation2 + $0xf0] sm:$0xff]
    %v362 = vld [vmem:[#allocation2 + $0xf8] sm:$0xff]
    %363 = vmatpush.msra.mxu0 %v361
    %364 = vmatpush.msra.mxu0 %v359
    %365 = vmatpush.msra.mxu0 %v357
    %366 = vmatpush.msra.mxu0 %v355
    %367 = vmatpush.msra.mxu0 %v353
    %368 = vmatpush.msra.mxu0 %v351
    %369 = vmatpush.msra.mxu0 %v349
    %370 = vmatpush.msra.mxu0 %v347
    %371 = vmatpush.msra.mxu0 %v345
    %372 = vmatpush.msra.mxu0 %v343
    %373 = vmatpush.msra.mxu0 %v341
    %374 = vmatpush.msra.mxu0 %v339
    %375 = vmatpush.msra.mxu0 %v337
    %376 = vmatpush.msra.mxu0 %v335
    %377 = vmatpush.msra.mxu0 %v333
    %378 = vmatpush.msra.mxu0 %v331
    %379 = vmatmul.f32.gmra.mxu0 %v330
    %v380 = vpop.f32.mrf.mxu0
    %v381 = vadd.f32 0.0, %v380
    %382 = vdwg.mxu0
    %383 = vmatpush.msra.mxu0 %v362
    %384 = vmatpush.msra.mxu0 %v360
    %385 = vmatpush.msra.mxu0 %v358
    %386 = vmatpush.msra.mxu0 %v356
    %387 = vmatpush.msra.mxu0 %v354
    %388 = vmatpush.msra.mxu0 %v352
    %389 = vmatpush.msra.mxu0 %v350
    %390 = vmatpush.msra.mxu0 %v348
    %391 = vmatpush.msra.mxu0 %v346
    %392 = vmatpush.msra.mxu0 %v344
    %393 = vmatpush.msra.mxu0 %v342
    %394 = vmatpush.msra.mxu0 %v340
    %395 = vmatpush.msra.mxu0 %v338
    %396 = vmatpush.msra.mxu0 %v336
    %397 = vmatpush.msra.mxu0 %v334
    %398 = vmatpush.msra.mxu0 %v332
    %399 = vmatmul.f32.gmra.mxu0 %v330
    %v400 = vpop.f32.mrf.mxu0
    %v401 = vadd.f32 0.0, %v400
    %402 = vdwg.mxu0
    %v403 = vmul.f32 %v401, 2.0
    %v404 = vld [vmem:[%s4] sm:$0x1]
    %v406 = vperm.slane %v404, 0
    %v408 = vadd.f32 %v403, %v406
    %v409 = vsub.f32 0.0, %v408
    %v410 = vmul.f32 %v409, 1.442695
    %v411 = vpow.pop %v410
    %v412 = vadd.f32 %v411, 1.0
    %v413 = vrcp.pop %v412
    %v414 = vmul.f32 %v412, %v413
    %v415 = vsub.f32 1.0, %v414
    %v416 = vmul.f32 %v413, %v415
    %v417 = vadd.f32 %v413, %v416
    %vm418 = vweird.f32 %v412
    %vm419 = vweird.f32 %v413
    %vm420 = vmor %vm418, %vm419
    %v421 = vsel %vm420, %v413, %v417
    %v422 = vand.u32 2147483647, %v412
    %vm423 = vcmp.eq.f32.partialorder %v422, 8.507059e+37
    %v424 = vand.u32 %v412, 2147483648
    %v425 = vor.u32 1.1754944e-38, %v424
    %v426 = vsel %vm423, %v425, %v421
    %v427 = vmul.f32 1.0, %v426
    %v428 = vsel %vm76, %v329, 0.0
    %429 = vadd.xlane.f32.xlu0 %v428
    %v430 = vpop.xlane.xlu0 %429
    %v431 = vsel %vm43, %v329, 0.0
    %v432 = vsel %vm76, %v431, 0.0
    %433 = vadd.xlane.f32.xlu0 %v432
    %v434 = vpop.xlane.xlu0 %433
    %v435 = vsub.f32 %v430, %v434
    %v436 = vmul.f32 %v435, %v427
    %v437 = vadd.f32 %v434, %v436
    %v438 = vmul.f32 %v381, %v437
    %v439 = vld [vmem:[%s5] sm:$0x1]
    %v441 = vperm.slane %v439, 0
    %v443 = vadd.f32 %v438, %v441
    %444 = vst [vmem:[%s6] sm:$0xff] %v443
    // Predicated region
    $region30: #{_lambda_.1} parent=1 // pred_check
      _
    $region31: #{_lambda_.1} parent=1 // pred_check_branch
      %446 = sbr.rel (0) target = $region33
    $region32: #{_lambda_.1} parent=1 // pred_region
      _
    $region33: #{_lambda_.1} parent=1 // pred_fallthru
      _
    // Predicated region
    $region34: #{_lambda_.1} parent=1 // pred_check
      _
    $region35: #{_lambda_.1} parent=1 // pred_check_branch
      %448 = sbr.rel (0) target = $region37
    $region36: #{_lambda_.1} parent=1 // pred_region
      _
    $region37: #{_lambda_.1} parent=1 // pred_fallthru
      _
    %449 = vsyncpa [#allocation3], 1

</llo_original>
